<compile_context>
chip_gen: v7x
topology: tpu7x:2x2x1
jax: 0.10.0
libtpu: 0.0.40
codegen_flags: <defaults>
</compile_context>

<pallas_src>
import functools

import jax
import jax.numpy as jnp
from jax.experimental import pallas as pl
from jax.experimental.pallas import tpu as pltpu


def _round_up(n, m):
    return ((n + m - 1) // m) * m


def mlp_kernel(x_ref, w1_ref, b1_ref, w2_ref, b2_ref, w3_ref, b3_ref, o_ref):
    # ---- layer 1: Linear + ReLU (+ Dropout == identity at eval) ----
    x = x_ref[...]                                        # bf16 (tb, D0) feeds MXU
    h1 = jnp.dot(x, w1_ref[...], preferred_element_type=jnp.float32)
    h1 = jnp.maximum(h1 + b1_ref[...], 0.0)               # bias/ReLU in f32

    # ---- layer 2: Linear + ReLU (+ Dropout == identity at eval) ----
    h2 = jnp.dot(h1.astype(jnp.bfloat16), w2_ref[...],
                 preferred_element_type=jnp.float32)
    h2 = jnp.maximum(h2 + b2_ref[...], 0.0)

    # ---- classifier head: Linear(prev -> num_classes) ----
    # w3 is 128-col padded in VMEM for the MXU; only the real C logits are
    # written back to HBM (narrow output block).
    logits = jnp.dot(h2.astype(jnp.bfloat16), w3_ref[...],
                     preferred_element_type=jnp.float32)
    c = o_ref.shape[-1]
    o_ref[...] = (logits[:, :c] + b3_ref[...]).astype(o_ref.dtype)


def prepare_params(params):
    """One-time parameter prep (hoisted out of the forward path).

    Weights -> bf16, hidden/output dims padded to multiples of 128 for MXU /
    lane-dense layout. The first layer keeps its true input dim (so x is never
    over-padded); the classifier bias keeps its true width (narrow output)."""
    w1, b1 = params["w1"], params["b1"]
    w2, b2 = params["w2"], params["b2"]
    w3, b3 = params["w3"], params["b3"]
    D0, H1 = w1.shape
    H2, C = w2.shape[1], w3.shape[1]
    H1p, H2p, Cp = (_round_up(d, 128) for d in (H1, H2, C))

    bf16, f32 = jnp.bfloat16, jnp.float32
    return {
        "w1": jnp.zeros((D0, H1p), bf16).at[:, :H1].set(w1.astype(bf16)),
        "b1": jnp.zeros((1, H1p), f32).at[:, :H1].set(b1.astype(f32)),
        "w2": jnp.zeros((H1p, H2p), bf16).at[:H1, :H2].set(w2.astype(bf16)),
        "b2": jnp.zeros((1, H2p), f32).at[:, :H2].set(b2.astype(f32)),
        "w3": jnp.zeros((H2p, Cp), bf16).at[:H2, :C].set(w3.astype(bf16)),
        "b3": b3.astype(f32).reshape(1, C),               # true width (narrow out)
    }


@functools.partial(jax.jit, static_argnames=("tile_b",))
def ablation_classifier_forward(x, pparams, *, tile_b=512):
    """x: (B, D_in) float32. pparams: output of prepare_params. Returns (B, C) f32."""
    w1, b1 = pparams["w1"], pparams["b1"]
    w2, b2 = pparams["w2"], pparams["b2"]
    w3, b3 = pparams["w3"], pparams["b3"]

    B, D0 = x.shape
    H1p, H2p, Cp = w1.shape[1], w2.shape[1], w3.shape[1]
    C = b3.shape[1]

    # Balanced batch tiling: tiles are multiples of 16 sublanes (bf16 packing),
    # padding is <16 rows per tile, and the grid keeps >=2 parallel steps when
    # the batch is large enough so both v7x TensorCores get work.
    B16 = _round_up(B, 16)
    n_tiles = max(pl.cdiv(B16, tile_b), 2 if B16 >= 32 else 1)
    tb = _round_up(pl.cdiv(B16, n_tiles), 16)
    Bp = tb * n_tiles

    # Single fused pad + bf16 cast of the activation stream (under jit).
    xp = jnp.zeros((Bp, D0), jnp.bfloat16).at[:B].set(x.astype(jnp.bfloat16))

    const = lambda i: (0, 0)  # weights/biases: one block, stays VMEM-resident

    cost = pl.CostEstimate(
        flops=2 * Bp * (D0 * H1p + H1p * H2p + H2p * Cp),
        transcendentals=0,
        bytes_accessed=(xp.size * 2                              # bf16 x
                        + (w1.size + w2.size + w3.size) * 2      # bf16 weights
                        + (b1.size + b2.size + b3.size) * 4      # f32 biases
                        + Bp * C * 4),                           # narrow f32 out
    )

    out = pl.pallas_call(
        mlp_kernel,
        out_shape=jax.ShapeDtypeStruct((Bp, C), jnp.float32),
        grid_spec=pltpu.PrefetchScalarGridSpec(
            num_scalar_prefetch=0,
            grid=(n_tiles,),
            in_specs=[
                pl.BlockSpec((tb, D0), lambda i: (i, 0)),   # x tile (full D0, no pad)
                pl.BlockSpec((D0, H1p), const),             # w1
                pl.BlockSpec((1, H1p), const),               # b1
                pl.BlockSpec((H1p, H2p), const),             # w2
                pl.BlockSpec((1, H2p), const),               # b2
                pl.BlockSpec((H2p, Cp), const),              # w3 (128-col padded)
                pl.BlockSpec((1, C), const),                 # b3 (true width)
            ],
            out_specs=pl.BlockSpec((tb, C), lambda i: (i, 0)),   # narrow output
        ),
        compiler_params=pltpu.CompilerParams(
            dimension_semantics=("parallel",),               # v7x: 2 TCs
            vmem_limit_bytes=32 * 1024 * 1024,               # safe on v7x 64 MiB
        ),
        cost_estimate=cost,
    )(xp, w1, b1, w2, b2, w3, b3)

    return out[:B]


def init_params(key, input_dim, hidden_dims=(256, 128), num_classes=2):
    """Deterministic init mirroring nn.Linear default (uniform +/- 1/sqrt(fan_in)).
    Weights are stored transposed: (in_features, out_features)."""
    dims = [input_dim] + list(hidden_dims) + [num_classes]
    params = {}
    names = ["1", "2", "3"]
    for name, (d_in, d_out) in zip(names, zip(dims[:-1], dims[1:])):
        key, kw, kb = jax.random.split(key, 3)
        bound = 1.0 / jnp.sqrt(d_in)
        params[f"w{name}"] = jax.random.uniform(
            kw, (d_in, d_out), jnp.float32, -bound, bound)
        params[f"b{name}"] = jax.random.uniform(
            kb, (1, d_out), jnp.float32, -bound, bound)
    return params


def reference_forward(x, params):
    h = jnp.maximum(x @ params["w1"] + params["b1"], 0.0)
    h = jnp.maximum(h @ params["w2"] + params["b2"], 0.0)
    return h @ params["w3"] + params["b3"]


if __name__ == "__main__":
    key = jax.random.PRNGKey(0)
    key, kx, kx2 = jax.random.split(key, 3)

    B, D_IN = 8, 32                 # small batch / feature dim
    HIDDEN = (256, 128)             # module defaults

    params = init_params(key, D_IN, HIDDEN, num_classes=2)
    pparams = prepare_params(params)   # pad/cast once, reused across calls

    # Small-batch path (single grid step, clamped tile).
    x = jax.random.normal(kx, (B, D_IN), jnp.float32)
    out = jax.block_until_ready(ablation_classifier_forward(x, pparams))
    ref = reference_forward(x, params)
    assert out.shape == (B, 2)
    # bf16 activations/weights on the MXU => loosened tolerance vs f32 reference
    assert jnp.allclose(out, ref, atol=1e-1, rtol=1e-2), "mismatch (small batch)"

    # Larger batch exercising the multi-step batch grid + ragged-batch handling.
    B2 = 300
    x2 = jax.random.normal(kx2, (B2, D_IN), jnp.float32)
    out2 = jax.block_until_ready(
        ablation_classifier_forward(x2, pparams, tile_b=128))
    ref2 = reference_forward(x2, params)
    assert out2.shape == (B2, 2)
    assert jnp.allclose(out2, ref2, atol=1e-1, rtol=1e-2), "mismatch (tiled batch)"

    print("KERNEL_OK")
</pallas_src>

<mosaic_0001>
module attributes {stable_mosaic.version = 11 : i64} {
  func.func @mlp_kernel(%arg0: i32, %arg1: memref<16x32xbf16, #tpu.memory_space<vmem>>, %arg2: memref<32x256xbf16, #tpu.memory_space<vmem>>, %arg3: memref<1x256xf32, #tpu.memory_space<vmem>>, %arg4: memref<256x128xbf16, #tpu.memory_space<vmem>>, %arg5: memref<1x128xf32, #tpu.memory_space<vmem>>, %arg6: memref<128x128xbf16, #tpu.memory_space<vmem>>, %arg7: memref<1x2xf32, #tpu.memory_space<vmem>>, %arg8: memref<16x2xf32, #tpu.memory_space<vmem>>) attributes {dimension_semantics = [#tpu.dimension_semantics<parallel>], iteration_bounds = array<i64: 1>, scalar_prefetch = 0 : i64, scratch_operands = 0 : i64, tpu.core_type = #tpu.core_type<tc>, window_params = [{transform_indices = @transform_0, window_bounds = array<i64: 16, 32>}, {pipeline_mode = #tpu.pipeline_mode<synchronous>, transform_indices = @transform_1, window_bounds = array<i64: 32, 256>}, {pipeline_mode = #tpu.pipeline_mode<synchronous>, transform_indices = @transform_2, window_bounds = array<i64: 1, 256>}, {pipeline_mode = #tpu.pipeline_mode<synchronous>, transform_indices = @transform_3, window_bounds = array<i64: 256, 128>}, {pipeline_mode = #tpu.pipeline_mode<synchronous>, transform_indices = @transform_4, window_bounds = array<i64: 1, 128>}, {pipeline_mode = #tpu.pipeline_mode<synchronous>, transform_indices = @transform_5, window_bounds = array<i64: 128, 128>}, {pipeline_mode = #tpu.pipeline_mode<synchronous>, transform_indices = @transform_6, window_bounds = array<i64: 1, 2>}, {transform_indices = @transform_7, window_bounds = array<i64: 16, 2>}]} {
    %c0 = arith.constant 0 : index
    %c0_0 = arith.constant 0 : index
    %0 = vector.load %arg1[%c0, %c0_0] : memref<16x32xbf16, #tpu.memory_space<vmem>>, vector<16x32xbf16>
    %c0_1 = arith.constant 0 : index
    %c0_2 = arith.constant 0 : index
    %1 = vector.load %arg2[%c0_1, %c0_2] : memref<32x256xbf16, #tpu.memory_space<vmem>>, vector<32x256xbf16>
    %cst = arith.constant dense<0.000000e+00> : vector<16x256xf32>
    %2 = tpu.matmul %0, %1, %cst {dimension_numbers = #tpu.dot_dimension_numbers<[1], [0], [0], [1], [0, 0, 1, 1], [], []>} : vector<16x32xbf16>, vector<32x256xbf16>, vector<16x256xf32> -> vector<16x256xf32>
    %c0_3 = arith.constant 0 : index
    %c0_4 = arith.constant 0 : index
    %3 = vector.load %arg3[%c0_3, %c0_4] : memref<1x256xf32, #tpu.memory_space<vmem>>, vector<1x256xf32>
    %4 = vector.broadcast %3 : vector<1x256xf32> to vector<16x256xf32>
    %5 = arith.addf %2, %4 : vector<16x256xf32>
    %cst_5 = arith.constant 0.000000e+00 : f32
    %6 = vector.broadcast %cst_5 : f32 to vector<16x256xf32>
    %7 = arith.maximumf %5, %6 : vector<16x256xf32>
    %8 = arith.truncf %7 : vector<16x256xf32> to vector<16x256xbf16>
    %c0_6 = arith.constant 0 : index
    %c0_7 = arith.constant 0 : index
    %9 = vector.load %arg4[%c0_6, %c0_7] : memref<256x128xbf16, #tpu.memory_space<vmem>>, vector<256x128xbf16>
    %cst_8 = arith.constant dense<0.000000e+00> : vector<16x128xf32>
    %10 = tpu.matmul %8, %9, %cst_8 {dimension_numbers = #tpu.dot_dimension_numbers<[1], [0], [0], [1], [0, 0, 1, 1], [], []>} : vector<16x256xbf16>, vector<256x128xbf16>, vector<16x128xf32> -> vector<16x128xf32>
    %c0_9 = arith.constant 0 : index
    %c0_10 = arith.constant 0 : index
    %11 = vector.load %arg5[%c0_9, %c0_10] : memref<1x128xf32, #tpu.memory_space<vmem>>, vector<1x128xf32>
    %12 = vector.broadcast %11 : vector<1x128xf32> to vector<16x128xf32>
    %13 = arith.addf %10, %12 : vector<16x128xf32>
    %cst_11 = arith.constant 0.000000e+00 : f32
    %14 = vector.broadcast %cst_11 : f32 to vector<16x128xf32>
    %15 = arith.maximumf %13, %14 : vector<16x128xf32>
    %16 = arith.truncf %15 : vector<16x128xf32> to vector<16x128xbf16>
    %c0_12 = arith.constant 0 : index
    %c0_13 = arith.constant 0 : index
    %17 = vector.load %arg6[%c0_12, %c0_13] : memref<128x128xbf16, #tpu.memory_space<vmem>>, vector<128x128xbf16>
    %cst_14 = arith.constant dense<0.000000e+00> : vector<16x128xf32>
    %18 = tpu.matmul %16, %17, %cst_14 {dimension_numbers = #tpu.dot_dimension_numbers<[1], [0], [0], [1], [0, 0, 1, 1], [], []>} : vector<16x128xbf16>, vector<128x128xbf16>, vector<16x128xf32> -> vector<16x128xf32>
    %19 = vector.extract_strided_slice %18 {offsets = [0, 0], sizes = [16, 2], strides = [1, 1]} : vector<16x128xf32> to vector<16x2xf32>
    %c0_15 = arith.constant 0 : index
    %c0_16 = arith.constant 0 : index
    %20 = vector.load %arg7[%c0_15, %c0_16] : memref<1x2xf32, #tpu.memory_space<vmem>>, vector<1x2xf32>
    %21 = vector.broadcast %20 : vector<1x2xf32> to vector<16x2xf32>
    %22 = arith.addf %19, %21 : vector<16x2xf32>
    %c0_17 = arith.constant 0 : index
    %c0_18 = arith.constant 0 : index
    %23 = vector.load %arg8[%c0_17, %c0_18] : memref<16x2xf32, #tpu.memory_space<vmem>>, vector<16x2xf32>
    tpu.vector_store %arg8[%c0_17, %c0_18], %22 {strides = array<i32>} : memref<16x2xf32, #tpu.memory_space<vmem>>, vector<16x2xf32>,
    return
  }
  func.func @transform_0(%arg0: i32) -> (i32, i32) {
    %c0_i32 = arith.constant 0 : i32
    %c0_i32_0 = arith.constant 0 : i32
    return %arg0, %c0_i32 : i32, i32
  }
  func.func @transform_1(%arg0: i32) -> (i32, i32) {
    %c0_i32 = arith.constant 0 : i32
    %c0_i32_0 = arith.constant 0 : i32
    %c0_i32_1 = arith.constant 0 : i32
    return %c0_i32, %c0_i32_0 : i32, i32
  }
  func.func @transform_2(%arg0: i32) -> (i32, i32) {
    %c0_i32 = arith.constant 0 : i32
    %c0_i32_0 = arith.constant 0 : i32
    %c0_i32_1 = arith.constant 0 : i32
    return %c0_i32, %c0_i32_0 : i32, i32
  }
  func.func @transform_3(%arg0: i32) -> (i32, i32) {
    %c0_i32 = arith.constant 0 : i32
    %c0_i32_0 = arith.constant 0 : i32
    %c0_i32_1 = arith.constant 0 : i32
    return %c0_i32, %c0_i32_0 : i32, i32
  }
  func.func @transform_4(%arg0: i32) -> (i32, i32) {
    %c0_i32 = arith.constant 0 : i32
    %c0_i32_0 = arith.constant 0 : i32
    %c0_i32_1 = arith.constant 0 : i32
    return %c0_i32, %c0_i32_0 : i32, i32
  }
  func.func @transform_5(%arg0: i32) -> (i32, i32) {
    %c0_i32 = arith.constant 0 : i32
    %c0_i32_0 = arith.constant 0 : i32
    %c0_i32_1 = arith.constant 0 : i32
    return %c0_i32, %c0_i32_0 : i32, i32
  }
  func.func @transform_6(%arg0: i32) -> (i32, i32) {
    %c0_i32 = arith.constant 0 : i32
    %c0_i32_0 = arith.constant 0 : i32
    %c0_i32_1 = arith.constant 0 : i32
    return %c0_i32, %c0_i32_0 : i32, i32
  }
  func.func @transform_7(%arg0: i32) -> (i32, i32) {
    %c0_i32 = arith.constant 0 : i32
    %c0_i32_0 = arith.constant 0 : i32
    return %arg0, %c0_i32 : i32, i32
  }
}

</mosaic_0001>

<llo_original>
// kernel: ablation_classifier_forward.1
$region0: #{ablation_classifier_forward.1}
  #allocation0 [shape = 'u32[]', space=smem, size = 0x4, offset = 0x4, fixed_abs, tag = 'smem constant byte address 0x4 - core index']
  #allocation1 [shape = 'u32[144,128]{1,0:T(1,128)}', space=vmem, size = 0x12000, scoped, tag = 'internal scratch']
  %s0 = inlined_call_operand.vmem [shape: bf16[16,32], index: 0, kind: input, shape index: {}]
  %s1 = inlined_call_operand.vmem [shape: bf16[32,256], index: 1, kind: input, shape index: {}]
  %s2 = inlined_call_operand.vmem [shape: f32[1,256], index: 2, kind: input, shape index: {}]
  %s3 = inlined_call_operand.hbm [shape: bf16[256,128], index: 3, kind: input, shape index: {}]
  %s4 = inlined_call_operand.vmem [shape: f32[1,128], index: 4, kind: input, shape index: {}]
  %s5 = inlined_call_operand.hbm [shape: bf16[128,128], index: 5, kind: input, shape index: {}]
  %s6 = inlined_call_operand.vmem [shape: f32[1,2], index: 6, kind: input, shape index: {}]
  %s7 = inlined_call_operand.vmem [shape: f32[16,2], index: 7, kind: output, shape index: {}]
  %s8 = sld [smem:[#allocation0]]
  $region46: #{ablation_classifier_forward.1} parent=0
    _
  %s10 = ssub.s32 1, %s8
  %s11 = scalar_select 0, %s10, %s8
  $region1: #{ablation_classifier_forward.1} parent=0
    #allocation2 [shape = 'u8[65536]{0}', space=vmem, size = 0x10000, scoped, tag = 'input window, operand 3, single buffered']
    #allocation3 [shape = 's32[1]{0}', space=sflag, size = 0x4, scoped, tag = 'scoped memory for ablation_classifier_forward.1']
    #allocation4 [shape = 'u8[32768]{0}', space=vmem, size = 0x8000, scoped, tag = 'input window, operand 5, single buffered']
    #allocation5 [shape = 's32[1]{0}', space=sflag, size = 0x4, scoped, tag = 'scoped memory for ablation_classifier_forward.1']
    %12 = vsyncpa [#allocation3], 0
    %13 = vsyncpa [#allocation5], 0
    // Predicated region
    $region2: #{ablation_classifier_forward.1} parent=1 // pred_check
      _
    $region3: #{ablation_classifier_forward.1} parent=1 // pred_check_branch
      %15 = sbr.rel (0) target = $region5
    $region4: #{ablation_classifier_forward.1} parent=1 // pred_region
      _
    $region5: #{ablation_classifier_forward.1} parent=1 // pred_fallthru
      _
    // Predicated region
    $region6: #{ablation_classifier_forward.1} parent=1 // pred_check
      _
    $region7: #{ablation_classifier_forward.1} parent=1 // pred_check_branch
      %17 = sbr.rel (0) target = $region9
    $region8: #{ablation_classifier_forward.1} parent=1 // pred_region
      _
    $region9: #{ablation_classifier_forward.1} parent=1 // pred_fallthru
      _
    // Predicated region
    $region10: #{ablation_classifier_forward.1} parent=1 // pred_check
      _
    $region11: #{ablation_classifier_forward.1} parent=1 // pred_check_branch
      %19 = sbr.rel (0) target = $region13
    $region12: #{ablation_classifier_forward.1} parent=1 // pred_region
      _
    $region13: #{ablation_classifier_forward.1} parent=1 // pred_fallthru
      _
    // Predicated region
    $region14: #{ablation_classifier_forward.1} parent=1 // pred_check
      _
    $region15: #{ablation_classifier_forward.1} parent=1 // pred_check_branch
      %21 = sbr.rel (0) target = $region17
    $region16: #{ablation_classifier_forward.1} parent=1 // pred_region
      %s23 = ssub.s32 2048, 2048
      %24 = vsyncadd [#allocation3], %s23
      %s25 = sshll.u32 [#allocation2], 4
      %s26 = int_to_ptr.vmem [resolvable:$true] %s25
      %31 = dma.hbm_to_vmem [thread:$0]  %s3, 2048, %s26, [#allocation3], 64, 64, 4
    $region17: #{ablation_classifier_forward.1} parent=1 // pred_fallthru
      _
    // Predicated region
    $region18: #{ablation_classifier_forward.1} parent=1 // pred_check
      _
    $region19: #{ablation_classifier_forward.1} parent=1 // pred_check_branch
      %33 = sbr.rel (0) target = $region21
    $region20: #{ablation_classifier_forward.1} parent=1 // pred_region
      _
    $region21: #{ablation_classifier_forward.1} parent=1 // pred_fallthru
      _
    // Predicated region
    $region22: #{ablation_classifier_forward.1} parent=1 // pred_check
      _
    $region23: #{ablation_classifier_forward.1} parent=1 // pred_check_branch
      %35 = sbr.rel (0) target = $region25
    $region24: #{ablation_classifier_forward.1} parent=1 // pred_region
      %s37 = ssub.s32 1024, 1024
      %38 = vsyncadd [#allocation5], %s37
      %s39 = sshll.u32 [#allocation4], 4
      %s40 = int_to_ptr.vmem [resolvable:$true] %s39
      %45 = dma.hbm_to_vmem [thread:$0]  %s5, 1024, %s40, [#allocation5], 64, 64, 4
    $region25: #{ablation_classifier_forward.1} parent=1 // pred_fallthru
      _
    // Predicated region
    $region26: #{ablation_classifier_forward.1} parent=1 // pred_check
      _
    $region27: #{ablation_classifier_forward.1} parent=1 // pred_check_branch
      %47 = sbr.rel (0) target = $region29
    $region28: #{ablation_classifier_forward.1} parent=1 // pred_region
      _
    $region29: #{ablation_classifier_forward.1} parent=1 // pred_fallthru
      _
    // Predicated region
    $region30: #{ablation_classifier_forward.1} parent=1 // pred_check
      _
    $region31: #{ablation_classifier_forward.1} parent=1 // pred_check_branch
      %49 = sbr.rel (0) target = $region33
    $region32: #{ablation_classifier_forward.1} parent=1 // pred_region
      %50 = dma.done [#allocation3], 2048
    $region33: #{ablation_classifier_forward.1} parent=1 // pred_fallthru
      _
    // Predicated region
    $region34: #{ablation_classifier_forward.1} parent=1 // pred_check
      _
    $region35: #{ablation_classifier_forward.1} parent=1 // pred_check_branch
      %52 = sbr.rel (0) target = $region37
    $region36: #{ablation_classifier_forward.1} parent=1 // pred_region
      %53 = dma.done [#allocation5], 1024
    $region37: #{ablation_classifier_forward.1} parent=1 // pred_fallthru
      _
    %v55 = vld [vmem:[%s0] sm:$0xf]
    %v56 = vld [vmem:[%s0 + $0x4] sm:$0xf]
    %v57 = vld [vmem:[%s1] sm:$0xff]
    %v58 = vld [vmem:[%s1 + $0x8] sm:$0xff]
    %v59 = vld [vmem:[%s1 + $0x10] sm:$0xff]
    %v60 = vld [vmem:[%s1 + $0x18] sm:$0xff]
    %v61 = vld [vmem:[%s2] sm:$0x3]
    %v63 = vlaneseq
    %v64 = vshrl.u32 %v63, 7
    %v65 = vsub.s32 0, %v64
    %v66 = vrot.slane %v61, %v65
    %v67 = vlaneseq
    %v68 = vshrl.u32 %v67, 7
    %v69 = vsub.s32 1, %v68
    %v70 = vrot.slane %v61, %v69
    %v75 = vunpack.c.l.b16 %v55
    %v76 = vunpack.c.l.b16 %v56
    %v77 = vpack.c.b16 %v76, %v75
    %v82 = vunpack.c.l.b16 %v57
    %v83 = vunpack.c.h.b16 %v57
    %v84 = vunpack.c.l.b16 %v58
    %v85 = vunpack.c.h.b16 %v58
    %v86 = vunpack.c.l.b16 %v59
    %v87 = vunpack.c.h.b16 %v59
    %v88 = vunpack.c.l.b16 %v60
    %v89 = vunpack.c.h.b16 %v60
    %v90 = vpack.c.b16 %v84, %v82
    %v91 = vpack.c.b16 %v85, %v83
    %v92 = vpack.c.b16 %v88, %v86
    %v93 = vpack.c.b16 %v89, %v87
    %vm98 = vcmask 261120
    %v100 = vsel %vm98, %v77, 0
    %102 = vmatprep.subr.bf16.mxu0 %v91
    %103 = vmatpush1.bf16.msra.mxu0 %v90
    %104 = vmatprep.subr.bf16.mxu0 %v93
    %105 = vmatpush1.bf16.msra.mxu0 %v92
    %106 = vmatprep.subr.bf16.mxu0 0
    %107 = vmatpush1.bf16.msra.mxu0 0
    %108 = vmatprep.subr.bf16.mxu0 0
    %109 = vmatpush1.bf16.msra.mxu0 0
    %110 = vmatprep.subr.bf16.mxu0 0
    %111 = vmatpush1.bf16.msra.mxu0 0
    %112 = vmatprep.subr.bf16.mxu0 0
    %113 = vmatpush1.bf16.msra.mxu0 0
    %114 = vmatprep.subr.bf16.mxu0 0
    %115 = vmatpush1.bf16.msra.mxu0 0
    %116 = vmatprep.subr.bf16.mxu0 0
    %117 = vmatpush1.bf16.msra.mxu0 0
    %118 = vmatprep.subr.bf16.mxu0 0
    %119 = vmatpush1.bf16.msra.mxu0 0
    %120 = vmatprep.subr.bf16.mxu0 0
    %121 = vmatpush1.bf16.msra.mxu0 0
    %122 = vmatprep.subr.bf16.mxu0 0
    %123 = vmatpush1.bf16.msra.mxu0 0
    %124 = vmatprep.subr.bf16.mxu0 0
    %125 = vmatpush1.bf16.msra.mxu0 0
    %126 = vmatprep.subr.bf16.mxu0 0
    %127 = vmatpush1.bf16.msra.mxu0 0
    %128 = vmatprep.subr.bf16.mxu0 0
    %129 = vmatpush1.bf16.msra.mxu0 0
    %130 = vmatprep.subr.bf16.mxu0 0
    %131 = vmatpush1.bf16.msra.mxu0 0
    %132 = vmatprep.subr.bf16.mxu0 0
    %133 = vmatpush1.bf16.msra.mxu0 0
    %134 = vmatprep.mubr.bf16.mxu0 0
    %135 = vmatmul.mubr.bf16.gmra.mrb[0].mxu0 %v100
    %v136 = vpop.f32.mrb[0].mxu0
    %v137 = vadd.f32 %v66, %v136
    %v138 = vpop.f32.mrb[0].mxu0
    %v139 = vadd.f32 %v70, %v138
    %v140 = vpop.f32.mrb[0].mxu0
    %v141 = vadd.f32 %v66, %v140
    %v142 = vpop.f32.mrb[0].mxu0
    %v143 = vadd.f32 %v70, %v142
    %144 = vdwg.mxu0
    %v145 = vmax.f32 %v137, 0.0
    %v146 = vmax.f32 %v139, 0.0
    %v147 = vmax.f32 %v141, 0.0
    %v148 = vmax.f32 %v143, 0.0
    %v149 = vpack.c.bf16 %v147, %v145
    %v150 = vpack.c.bf16 %v148, %v146
    %v151 = vld [vmem:[#allocation2] sm:$0xf]
    %v152 = vld [vmem:[#allocation2 + $0x4] sm:$0xf]
    %v153 = vld [vmem:[#allocation2 + $0x8] sm:$0xf]
    %v154 = vld [vmem:[#allocation2 + $0xc] sm:$0xf]
    %v155 = vld [vmem:[#allocation2 + $0x10] sm:$0xf]
    %v156 = vld [vmem:[#allocation2 + $0x14] sm:$0xf]
    %v157 = vld [vmem:[#allocation2 + $0x18] sm:$0xf]
    %v158 = vld [vmem:[#allocation2 + $0x1c] sm:$0xf]
    %v159 = vld [vmem:[#allocation2 + $0x20] sm:$0xf]
    %v160 = vld [vmem:[#allocation2 + $0x24] sm:$0xf]
    %v161 = vld [vmem:[#allocation2 + $0x28] sm:$0xf]
    %v162 = vld [vmem:[#allocation2 + $0x2c] sm:$0xf]
    %v163 = vld [vmem:[#allocation2 + $0x30] sm:$0xf]
    %v164 = vld [vmem:[#allocation2 + $0x34] sm:$0xf]
    %v165 = vld [vmem:[#allocation2 + $0x38] sm:$0xf]
    %v166 = vld [vmem:[#allocation2 + $0x3c] sm:$0xf]
    %v167 = vld [vmem:[#allocation2 + $0x40] sm:$0xf]
    %v168 = vld [vmem:[#allocation2 + $0x44] sm:$0xf]
    %v169 = vld [vmem:[#allocation2 + $0x48] sm:$0xf]
    %v170 = vld [vmem:[#allocation2 + $0x4c] sm:$0xf]
    %v171 = vld [vmem:[#allocation2 + $0x50] sm:$0xf]
    %v172 = vld [vmem:[#allocation2 + $0x54] sm:$0xf]
    %v173 = vld [vmem:[#allocation2 + $0x58] sm:$0xf]
    %v174 = vld [vmem:[#allocation2 + $0x5c] sm:$0xf]
    %v175 = vld [vmem:[#allocation2 + $0x60] sm:$0xf]
    %v176 = vld [vmem:[#allocation2 + $0x64] sm:$0xf]
    %v177 = vld [vmem:[#allocation2 + $0x68] sm:$0xf]
    %v178 = vld [vmem:[#allocation2 + $0x6c] sm:$0xf]
    %v179 = vld [vmem:[#allocation2 + $0x70] sm:$0xf]
    %v180 = vld [vmem:[#allocation2 + $0x74] sm:$0xf]
    %v181 = vld [vmem:[#allocation2 + $0x78] sm:$0xf]
    %v182 = vld [vmem:[#allocation2 + $0x7c] sm:$0xf]
    %v183 = vld [vmem:[%s4] sm:$0x1]
    %v185 = vlaneseq
    %v186 = vshrl.u32 %v185, 7
    %v187 = vsub.s32 0, %v186
    %v188 = vrot.slane %v183, %v187
    %v222 = vunpack.c.l.b16 %v151
    %v223 = vunpack.c.l.b16 %v152
    %v224 = vunpack.c.l.b16 %v153
    %v225 = vunpack.c.l.b16 %v154
    %v226 = vunpack.c.l.b16 %v155
    %v227 = vunpack.c.l.b16 %v156
    %v228 = vunpack.c.l.b16 %v157
    %v229 = vunpack.c.l.b16 %v158
    %v230 = vunpack.c.l.b16 %v159
    %v231 = vunpack.c.l.b16 %v160
    %v232 = vunpack.c.l.b16 %v161
    %v233 = vunpack.c.l.b16 %v162
    %v234 = vunpack.c.l.b16 %v163
    %v235 = vunpack.c.l.b16 %v164
    %v236 = vunpack.c.l.b16 %v165
    %v237 = vunpack.c.l.b16 %v166
    %v238 = vunpack.c.l.b16 %v167
    %v239 = vunpack.c.l.b16 %v168
    %v240 = vunpack.c.l.b16 %v169
    %v241 = vunpack.c.l.b16 %v170
    %v242 = vunpack.c.l.b16 %v171
    %v243 = vunpack.c.l.b16 %v172
    %v244 = vunpack.c.l.b16 %v173
    %v245 = vunpack.c.l.b16 %v174
    %v246 = vunpack.c.l.b16 %v175
    %v247 = vunpack.c.l.b16 %v176
    %v248 = vunpack.c.l.b16 %v177
    %v249 = vunpack.c.l.b16 %v178
    %v250 = vunpack.c.l.b16 %v179
    %v251 = vunpack.c.l.b16 %v180
    %v252 = vunpack.c.l.b16 %v181
    %v253 = vunpack.c.l.b16 %v182
    %v254 = vpack.c.b16 %v223, %v222
    %v255 = vpack.c.b16 %v225, %v224
    %v256 = vpack.c.b16 %v227, %v226
    %v257 = vpack.c.b16 %v229, %v228
    %v258 = vpack.c.b16 %v231, %v230
    %v259 = vpack.c.b16 %v233, %v232
    %v260 = vpack.c.b16 %v235, %v234
    %v261 = vpack.c.b16 %v237, %v236
    %v262 = vpack.c.b16 %v239, %v238
    %v263 = vpack.c.b16 %v241, %v240
    %v264 = vpack.c.b16 %v243, %v242
    %v265 = vpack.c.b16 %v245, %v244
    %v266 = vpack.c.b16 %v247, %v246
    %v267 = vpack.c.b16 %v249, %v248
    %v268 = vpack.c.b16 %v251, %v250
    %v269 = vpack.c.b16 %v253, %v252
    %286 = vmatprep.subr.bf16.mxu0 0
    %287 = vmatpush1.bf16.msra.mxu0 %v254
    %288 = vmatprep.subr.bf16.mxu0 0
    %289 = vmatpush1.bf16.msra.mxu0 %v255
    %290 = vmatprep.subr.bf16.mxu0 0
    %291 = vmatpush1.bf16.msra.mxu0 %v256
    %292 = vmatprep.subr.bf16.mxu0 0
    %293 = vmatpush1.bf16.msra.mxu0 %v257
    %294 = vmatprep.subr.bf16.mxu0 0
    %295 = vmatpush1.bf16.msra.mxu0 %v258
    %296 = vmatprep.subr.bf16.mxu0 0
    %297 = vmatpush1.bf16.msra.mxu0 %v259
    %298 = vmatprep.subr.bf16.mxu0 0
    %299 = vmatpush1.bf16.msra.mxu0 %v260
    %300 = vmatprep.subr.bf16.mxu0 0
    %301 = vmatpush1.bf16.msra.mxu0 %v261
    %302 = vmatprep.subr.bf16.mxu0 0
    %303 = vmatpush1.bf16.msra.mxu0 %v262
    %304 = vmatprep.subr.bf16.mxu0 0
    %305 = vmatpush1.bf16.msra.mxu0 %v263
    %306 = vmatprep.subr.bf16.mxu0 0
    %307 = vmatpush1.bf16.msra.mxu0 %v264
    %308 = vmatprep.subr.bf16.mxu0 0
    %309 = vmatpush1.bf16.msra.mxu0 %v265
    %310 = vmatprep.subr.bf16.mxu0 0
    %311 = vmatpush1.bf16.msra.mxu0 %v266
    %312 = vmatprep.subr.bf16.mxu0 0
    %313 = vmatpush1.bf16.msra.mxu0 %v267
    %314 = vmatprep.subr.bf16.mxu0 0
    %315 = vmatpush1.bf16.msra.mxu0 %v268
    %316 = vmatprep.subr.bf16.mxu0 0
    %317 = vmatpush1.bf16.msra.mxu0 %v269
    %318 = vmatprep.mubr.bf16.mxu0 %v150
    %319 = vmatmul.mubr.bf16.gmra.mrb[0].mxu0 %v149
    %v320 = vpop.f32.mrb[0].mxu0
    %v321 = vadd.f32 %v188, %v320
    %v322 = vpop.f32.mrb[0].mxu0
    %v323 = vpop.f32.mrb[0].mxu0
    %v324 = vadd.f32 %v188, %v323
    %v325 = vpop.f32.mrb[0].mxu0
    %326 = vdwg.mxu0
    %v327 = vmax.f32 %v321, 0.0
    %v328 = vmax.f32 %v324, 0.0
    %v329 = vpack.c.bf16 %v328, %v327
    %v330 = vld [vmem:[#allocation4] sm:$0xf]
    %v331 = vld [vmem:[#allocation4 + $0x4] sm:$0xf]
    %v332 = vld [vmem:[#allocation4 + $0x8] sm:$0xf]
    %v333 = vld [vmem:[#allocation4 + $0xc] sm:$0xf]
    %v334 = vld [vmem:[#allocation4 + $0x10] sm:$0xf]
    %v335 = vld [vmem:[#allocation4 + $0x14] sm:$0xf]
    %v336 = vld [vmem:[#allocation4 + $0x18] sm:$0xf]
    %v337 = vld [vmem:[#allocation4 + $0x1c] sm:$0xf]
    %v338 = vld [vmem:[#allocation4 + $0x20] sm:$0xf]
    %v339 = vld [vmem:[#allocation4 + $0x24] sm:$0xf]
    %v340 = vld [vmem:[#allocation4 + $0x28] sm:$0xf]
    %v341 = vld [vmem:[#allocation4 + $0x2c] sm:$0xf]
    %v342 = vld [vmem:[#allocation4 + $0x30] sm:$0xf]
    %v343 = vld [vmem:[#allocation4 + $0x34] sm:$0xf]
    %v344 = vld [vmem:[#allocation4 + $0x38] sm:$0xf]
    %v345 = vld [vmem:[#allocation4 + $0x3c] sm:$0xf]
    %v362 = vunpack.c.l.b16 %v330
    %v363 = vunpack.c.l.b16 %v331
    %v364 = vunpack.c.l.b16 %v332
    %v365 = vunpack.c.l.b16 %v333
    %v366 = vunpack.c.l.b16 %v334
    %v367 = vunpack.c.l.b16 %v335
    %v368 = vunpack.c.l.b16 %v336
    %v369 = vunpack.c.l.b16 %v337
    %v370 = vunpack.c.l.b16 %v338
    %v371 = vunpack.c.l.b16 %v339
    %v372 = vunpack.c.l.b16 %v340
    %v373 = vunpack.c.l.b16 %v341
    %v374 = vunpack.c.l.b16 %v342
    %v375 = vunpack.c.l.b16 %v343
    %v376 = vunpack.c.l.b16 %v344
    %v377 = vunpack.c.l.b16 %v345
    %v378 = vpack.c.b16 %v363, %v362
    %v379 = vpack.c.b16 %v365, %v364
    %v380 = vpack.c.b16 %v367, %v366
    %v381 = vpack.c.b16 %v369, %v368
    %v382 = vpack.c.b16 %v371, %v370
    %v383 = vpack.c.b16 %v373, %v372
    %v384 = vpack.c.b16 %v375, %v374
    %v385 = vpack.c.b16 %v377, %v376
    %394 = vmatprep.subr.bf16.mxu0 0
    %395 = vmatpush1.bf16.msra.mxu0 %v378
    %396 = vmatprep.subr.bf16.mxu0 0
    %397 = vmatpush1.bf16.msra.mxu0 %v379
    %398 = vmatprep.subr.bf16.mxu0 0
    %399 = vmatpush1.bf16.msra.mxu0 %v380
    %400 = vmatprep.subr.bf16.mxu0 0
    %401 = vmatpush1.bf16.msra.mxu0 %v381
    %402 = vmatprep.subr.bf16.mxu0 0
    %403 = vmatpush1.bf16.msra.mxu0 %v382
    %404 = vmatprep.subr.bf16.mxu0 0
    %405 = vmatpush1.bf16.msra.mxu0 %v383
    %406 = vmatprep.subr.bf16.mxu0 0
    %407 = vmatpush1.bf16.msra.mxu0 %v384
    %408 = vmatprep.subr.bf16.mxu0 0
    %409 = vmatpush1.bf16.msra.mxu0 %v385
    %410 = vmatprep.subr.bf16.mxu0 0
    %411 = vmatpush1.bf16.msra.mxu0 0
    %412 = vmatprep.subr.bf16.mxu0 0
    %413 = vmatpush1.bf16.msra.mxu0 0
    %414 = vmatprep.subr.bf16.mxu0 0
    %415 = vmatpush1.bf16.msra.mxu0 0
    %416 = vmatprep.subr.bf16.mxu0 0
    %417 = vmatpush1.bf16.msra.mxu0 0
    %418 = vmatprep.subr.bf16.mxu0 0
    %419 = vmatpush1.bf16.msra.mxu0 0
    %420 = vmatprep.subr.bf16.mxu0 0
    %421 = vmatpush1.bf16.msra.mxu0 0
    %422 = vmatprep.subr.bf16.mxu0 0
    %423 = vmatpush1.bf16.msra.mxu0 0
    %424 = vmatprep.subr.bf16.mxu0 0
    %425 = vmatpush1.bf16.msra.mxu0 0
    %426 = vmatprep.mubr.bf16.mxu0 0
    %427 = vmatmul.mubr.bf16.gmra.mrb[0].mxu0 %v329
    %v428 = vpop.f32.mrb[0].mxu0
    %v429 = vadd.f32 0.0, %v428
    %v430 = vpop.f32.mrb[0].mxu0
    %v431 = vpop.f32.mrb[0].mxu0
    %v432 = vadd.f32 0.0, %v431
    %v433 = vpop.f32.mrb[0].mxu0
    %434 = vdwg.mxu0
    %v435 = vld [vmem:[%s6] sm:$0x1]
    %v437 = vlaneseq
    %v438 = vshrl.u32 %v437, 7
    %v439 = vsub.s32 0, %v438
    %v440 = vrot.slane %v435, %v439
    %v442 = vadd.f32 %v429, %v440
    %v443 = vadd.f32 %v432, %v440
    %vm444 = vcmask 15360
    %445 = vst.msk [vmem:[%s7] sm:$0xff] %vm444, %v442
    %446 = vst.msk [vmem:[%s7 + $0x8] sm:$0xff] %vm444, %v443
    // Predicated region
    $region38: #{ablation_classifier_forward.1} parent=1 // pred_check
      _
    $region39: #{ablation_classifier_forward.1} parent=1 // pred_check_branch
      %448 = sbr.rel (0) target = $region41
    $region40: #{ablation_classifier_forward.1} parent=1 // pred_region
      _
    $region41: #{ablation_classifier_forward.1} parent=1 // pred_fallthru
      _
    // Predicated region
    $region42: #{ablation_classifier_forward.1} parent=1 // pred_check
      _
    $region43: #{ablation_classifier_forward.1} parent=1 // pred_check_branch
      %450 = sbr.rel (0) target = $region45
    $region44: #{ablation_classifier_forward.1} parent=1 // pred_region
      _
    $region45: #{ablation_classifier_forward.1} parent=1 // pred_fallthru
      _
    %451 = vsyncpa [#allocation3], 1
    %452 = vsyncpa [#allocation5], 1

</llo_original>
